<compile_context>
chip_gen: v6e
topology: v6e:2x2x1
jax: 0.10.0
libtpu: 0.0.40
codegen_flags: <defaults>
</compile_context>

<pallas_src>
import math
import jax
import jax.numpy as jnp
from jax.experimental import pallas as pl
from jax.experimental.pallas import tpu as pltpu

TASKS = ['mort_short', 'mort_long', 'readm', 'dx', 'los_short', 'los_long',
         'fi_ac', 'im_disch', 'creat', 'bili', 'plate', 'wbc']
CLASSES = {'mort_short': 1, 'mort_long': 1, 'readm': 1, 'dx': 17,
           'los_short': 1, 'los_long': 1, 'fi_ac': 6, 'im_disch': 6,
           'creat': 5, 'bili': 5, 'plate': 5, 'wbc': 3}

LANE = 128            # TPU lane width: pad class dim to this
SUBLANE = 16          # batch-tile granularity (covers f32 and bf16 sublane tiles)
MAX_TB = 1024         # batch tile cap; x(f32)+out(f32) tiles double-buffered ~2 MiB,
                      # far under every generation's VMEM (incl. v7x 64 MiB)
MEGACORE_MIN_B = 32   # past this, force >=2 grid steps so both v7x TCs get work


def _round_up(n, m):
    return ((n + m - 1) // m) * m


def predict_output_kernel(x_ref, w_ref, b_ref, o_ref):
    # In-kernel bf16 cast of x (free under DMA/MXU slack), single-pass MXU
    # matmul with f32 accumulation, f32 bias add.
    x_bf = x_ref[...].astype(jnp.bfloat16)
    acc = jnp.dot(x_bf, w_ref[...], preferred_element_type=jnp.float32)
    o_ref[...] = (acc + b_ref[...]).astype(o_ref.dtype)


def predict_output(x, w_bf16, b_pad, n_classes, *, max_tb=MAX_TB):
    """x: (B, E) f32; w_bf16: (E, C_pad) bf16; b_pad: (1, C_pad) f32.
    Returns (B, n_classes) f32 — concatenated task logits."""
    B, E = x.shape
    C = w_bf16.shape[1]          # lane-padded class dim (128)

    # Balanced batch tiling: pick the tile count first, then split evenly, so
    # row padding is bounded by <SUBLANE instead of up to a full tile.  Force
    # >=2 grid steps once B > 32 so dimension_semantics=("parallel",) actually
    # shards the batch across both TensorCores on v7x.
    n_tiles = pl.cdiv(B, max_tb)
    if B > MEGACORE_MIN_B:
        n_tiles = max(n_tiles, 2)
    tb = _round_up(pl.cdiv(B, n_tiles), SUBLANE)
    b_rows = n_tiles * tb
    if b_rows != B:
        x = jnp.pad(x, ((0, b_rows - B), (0, 0)))

    cost = pl.CostEstimate(
        flops=2 * b_rows * E * C,
        transcendentals=0,
        bytes_accessed=b_rows * E * 4 + E * C * 2 + C * 4 + b_rows * C * 4,
    )

    out = pl.pallas_call(
        predict_output_kernel,
        out_shape=jax.ShapeDtypeStruct((b_rows, C), jnp.float32),
        grid_spec=pltpu.PrefetchScalarGridSpec(
            num_scalar_prefetch=0,
            grid=(n_tiles,),
            in_specs=[
                pl.BlockSpec((tb, E), lambda i: (i, 0)),   # x tile, pipelined
                pl.BlockSpec((E, C), lambda i: (0, 0)),    # W resident (32 KiB)
                pl.BlockSpec((1, C), lambda i: (0, 0)),    # bias resident
            ],
            out_specs=pl.BlockSpec((tb, C), lambda i: (i, 0)),
        ),
        compiler_params=pltpu.CompilerParams(
            dimension_semantics=("parallel",),             # megacore sharding
        ),
        cost_estimate=cost,
    )(x, w_bf16, b_pad)

    # Layout plumbing only: drop batch/lane padding to match the module's
    # (B, 52) f32 output.  Consumers able to index per-task columns in the
    # padded (B, 128) buffer directly can skip this extra copy.
    return out[:B, :n_classes]


def init_params(emb_out=128, tasks=TASKS, seed=0):
    """Deterministic init mimicking nn.Linear defaults (uniform +-1/sqrt(fan_in)),
    fuse all task heads into one (emb_out, C) weight, zero-pad C -> 128, and
    store W pre-cast to bf16 (one-time convert; no per-call cast kernel)."""
    bound = 1.0 / math.sqrt(emb_out)
    key = jax.random.PRNGKey(seed)
    ws, bs = [], []
    for i, task in enumerate(tasks):
        out_dim = CLASSES[task]
        kw, kb = jax.random.split(jax.random.fold_in(key, i))
        # PyTorch Linear weight is (out, in); store transposed (in, out).
        w_t = jax.random.uniform(kw, (out_dim, emb_out), jnp.float32,
                                 minval=-bound, maxval=bound)
        b_t = jax.random.uniform(kb, (out_dim,), jnp.float32,
                                 minval=-bound, maxval=bound)
        ws.append(w_t.T)
        bs.append(b_t)
    W = jnp.concatenate(ws, axis=1)            # (emb_out, C_total) f32
    b = jnp.concatenate(bs, axis=0)            # (C_total,) f32
    n_classes = W.shape[1]                     # 52

    c_pad = _round_up(n_classes, LANE)
    W_bf16 = jnp.pad(W, ((0, 0), (0, c_pad - n_classes))).astype(jnp.bfloat16)
    b_pad = jnp.pad(b, (0, c_pad - n_classes)).reshape(1, c_pad)
    return W_bf16, b_pad.astype(jnp.float32), n_classes


if __name__ == "__main__":
    emb_out = 128
    batch = 8
    W_bf16, b_pad, n_classes = init_params(emb_out=emb_out, tasks=TASKS, seed=0)

    key = jax.random.PRNGKey(0)
    x = jax.random.normal(key, (batch, emb_out), jnp.float32)

    out = predict_output(x, W_bf16, b_pad, n_classes)
    out = jax.block_until_ready(out)

    # Correctness check against a plain-JAX reference with the same
    # bf16-operand / f32-accumulate numerics as the kernel.
    x_b = x.astype(jnp.bfloat16).astype(jnp.float32)
    w_b = W_bf16.astype(jnp.float32)
    ref = (x_b @ w_b + b_pad)[:, :n_classes]

    assert out.shape == (batch, sum(CLASSES[t] for t in TASKS))
    assert jnp.allclose(out, ref, atol=1e-2, rtol=1e-2)

    print("KERNEL_OK")
</pallas_src>

<mosaic_0001>
module attributes {stable_mosaic.version = 11 : i64} {
  func.func @predict_output_kernel(%arg0: i32, %arg1: memref<16x128xf32, #tpu.memory_space<vmem>>, %arg2: memref<128x128xbf16, #tpu.memory_space<vmem>>, %arg3: memref<1x128xf32, #tpu.memory_space<vmem>>, %arg4: memref<16x128xf32, #tpu.memory_space<vmem>>) attributes {dimension_semantics = [#tpu.dimension_semantics<parallel>], iteration_bounds = array<i64: 1>, scalar_prefetch = 0 : i64, scratch_operands = 0 : i64, tpu.core_type = #tpu.core_type<tc>, window_params = [{transform_indices = @transform_0, window_bounds = array<i64: 16, 128>}, {pipeline_mode = #tpu.pipeline_mode<synchronous>, transform_indices = @transform_1, window_bounds = array<i64: 128, 128>}, {pipeline_mode = #tpu.pipeline_mode<synchronous>, transform_indices = @transform_2, window_bounds = array<i64: 1, 128>}, {transform_indices = @transform_3, window_bounds = array<i64: 16, 128>}]} {
    %c0 = arith.constant 0 : index
    %c0_0 = arith.constant 0 : index
    %0 = vector.load %arg1[%c0, %c0_0] : memref<16x128xf32, #tpu.memory_space<vmem>>, vector<16x128xf32>
    %1 = arith.truncf %0 : vector<16x128xf32> to vector<16x128xbf16>
    %c0_1 = arith.constant 0 : index
    %c0_2 = arith.constant 0 : index
    %2 = vector.load %arg2[%c0_1, %c0_2] : memref<128x128xbf16, #tpu.memory_space<vmem>>, vector<128x128xbf16>
    %cst = arith.constant dense<0.000000e+00> : vector<16x128xf32>
    %3 = tpu.matmul %1, %2, %cst {dimension_numbers = #tpu.dot_dimension_numbers<[1], [0], [0], [1], [0, 0, 1, 1], [], []>} : vector<16x128xbf16>, vector<128x128xbf16>, vector<16x128xf32> -> vector<16x128xf32>
    %c0_3 = arith.constant 0 : index
    %c0_4 = arith.constant 0 : index
    %4 = vector.load %arg3[%c0_3, %c0_4] : memref<1x128xf32, #tpu.memory_space<vmem>>, vector<1x128xf32>
    %5 = vector.broadcast %4 : vector<1x128xf32> to vector<16x128xf32>
    %6 = arith.addf %3, %5 : vector<16x128xf32>
    %c0_5 = arith.constant 0 : index
    %c0_6 = arith.constant 0 : index
    %7 = vector.load %arg4[%c0_5, %c0_6] : memref<16x128xf32, #tpu.memory_space<vmem>>, vector<16x128xf32>
    tpu.vector_store %arg4[%c0_5, %c0_6], %6 {strides = array<i32>} : memref<16x128xf32, #tpu.memory_space<vmem>>, vector<16x128xf32>,
    return
  }
  func.func @transform_0(%arg0: i32) -> (i32, i32) {
    %c0_i32 = arith.constant 0 : i32
    %c0_i32_0 = arith.constant 0 : i32
    return %arg0, %c0_i32 : i32, i32
  }
  func.func @transform_1(%arg0: i32) -> (i32, i32) {
    %c0_i32 = arith.constant 0 : i32
    %c0_i32_0 = arith.constant 0 : i32
    %c0_i32_1 = arith.constant 0 : i32
    return %c0_i32, %c0_i32_0 : i32, i32
  }
  func.func @transform_2(%arg0: i32) -> (i32, i32) {
    %c0_i32 = arith.constant 0 : i32
    %c0_i32_0 = arith.constant 0 : i32
    %c0_i32_1 = arith.constant 0 : i32
    return %c0_i32, %c0_i32_0 : i32, i32
  }
  func.func @transform_3(%arg0: i32) -> (i32, i32) {
    %c0_i32 = arith.constant 0 : i32
    %c0_i32_0 = arith.constant 0 : i32
    return %arg0, %c0_i32 : i32, i32
  }
}

</mosaic_0001>

<llo_original>
// kernel: tpu_custom_call.1
$region0: #{tpu_custom_call.1}
  #allocation0 [shape = 'u32[]', space=smem, size = 0x4, offset = 0x4, fixed_abs, tag = 'smem constant byte address 0x4 - core index']
  #allocation1 [shape = 'u32[144,128]{1,0:T(1,128)}', space=vmem, size = 0x12000, scoped, tag = 'internal scratch']
  %s0 = inlined_call_operand.hbm [shape: f32[16,128], index: 0, kind: input, shape index: {}]
  %s1 = inlined_call_operand.hbm [shape: bf16[128,128], index: 1, kind: input, shape index: {}]
  %s2 = inlined_call_operand.vmem [shape: f32[1,128], index: 2, kind: input, shape index: {}]
  %s3 = inlined_call_operand.hbm [shape: f32[16,128], index: 3, kind: output, shape index: {}]
  %s4 = sld [smem:[#allocation0]]
  $region30: #{tpu_custom_call.1} parent=0
    _
  %s6 = ssub.s32 1, %s4
  %s7 = scalar_select 0, %s6, %s4
  $region1: #{tpu_custom_call.1} parent=0
    #allocation2 [shape = 'u8[8192]{0}', space=vmem, size = 0x2000, scoped, tag = 'input window, operand 0, single buffered']
    #allocation3 [shape = 's32[1]{0}', space=sflag, size = 0x4, scoped, tag = 'scoped memory for tpu_custom_call.1']
    #allocation4 [shape = 's32[1]{0}', space=sflag, size = 0x4, scoped, tag = 'scoped memory for tpu_custom_call.1']
    #allocation5 [shape = 'u8[32768]{0}', space=vmem, size = 0x8000, scoped, tag = 'input window, operand 1, single buffered']
    #allocation6 [shape = 's32[1]{0}', space=sflag, size = 0x4, scoped, tag = 'scoped memory for tpu_custom_call.1']
    #allocation7 [shape = 'u8[8192]{0}', space=vmem, size = 0x2000, scoped, tag = 'output window, operand 0, single buffered']
    %8 = vsyncpa [#allocation3], 0
    %9 = vsyncpa [#allocation6], 0
    %10 = vsyncpa [#allocation4], 0
    // Predicated region
    $region2: #{tpu_custom_call.1} parent=1 // pred_check
      _
    $region3: #{tpu_custom_call.1} parent=1 // pred_check_branch
      %12 = sbr.rel (0) target = $region5
    $region4: #{tpu_custom_call.1} parent=1 // pred_region
      %s14 = ssub.s32 256, 256
      %15 = vsyncadd [#allocation3], %s14
      %s16 = sshll.u32 [#allocation2], 4
      %s17 = int_to_ptr.vmem [resolvable:$true] %s16
      %22 = dma.hbm_to_vmem [thread:$0]  %s0, 256, %s17, [#allocation3], 128, 128, 8
    $region5: #{tpu_custom_call.1} parent=1 // pred_fallthru
      _
    // Predicated region
    $region6: #{tpu_custom_call.1} parent=1 // pred_check
      _
    $region7: #{tpu_custom_call.1} parent=1 // pred_check_branch
      %24 = sbr.rel (0) target = $region9
    $region8: #{tpu_custom_call.1} parent=1 // pred_region
      %s26 = ssub.s32 1024, 1024
      %27 = vsyncadd [#allocation6], %s26
      %s28 = sshll.u32 [#allocation5], 4
      %s29 = int_to_ptr.vmem [resolvable:$true] %s28
      %34 = dma.hbm_to_vmem [thread:$0]  %s1, 1024, %s29, [#allocation6], 64, 64, 4
    $region9: #{tpu_custom_call.1} parent=1 // pred_fallthru
      _
    // Predicated region
    $region10: #{tpu_custom_call.1} parent=1 // pred_check
      _
    $region11: #{tpu_custom_call.1} parent=1 // pred_check_branch
      %36 = sbr.rel (0) target = $region13
    $region12: #{tpu_custom_call.1} parent=1 // pred_region
      _
    $region13: #{tpu_custom_call.1} parent=1 // pred_fallthru
      _
    // Predicated region
    $region14: #{tpu_custom_call.1} parent=1 // pred_check
      _
    $region15: #{tpu_custom_call.1} parent=1 // pred_check_branch
      %38 = sbr.rel (0) target = $region17
    $region16: #{tpu_custom_call.1} parent=1 // pred_region
      %39 = dma.done [#allocation3], 256
    $region17: #{tpu_custom_call.1} parent=1 // pred_fallthru
      _
    // Predicated region
    $region18: #{tpu_custom_call.1} parent=1 // pred_check
      _
    $region19: #{tpu_custom_call.1} parent=1 // pred_check_branch
      %41 = sbr.rel (0) target = $region21
    $region20: #{tpu_custom_call.1} parent=1 // pred_region
      %42 = dma.done [#allocation6], 1024
    $region21: #{tpu_custom_call.1} parent=1 // pred_fallthru
      _
    %v44 = vld [vmem:[#allocation2] sm:$0xff]
    %v45 = vld [vmem:[#allocation2 + $0x8] sm:$0xff]
    %v46 = vpack.c.bf16 %v45, %v44
    %v47 = vld [vmem:[#allocation5] sm:$0xf]
    %v48 = vld [vmem:[#allocation5 + $0x4] sm:$0xf]
    %v49 = vld [vmem:[#allocation5 + $0x8] sm:$0xf]
    %v50 = vld [vmem:[#allocation5 + $0xc] sm:$0xf]
    %v51 = vld [vmem:[#allocation5 + $0x10] sm:$0xf]
    %v52 = vld [vmem:[#allocation5 + $0x14] sm:$0xf]
    %v53 = vld [vmem:[#allocation5 + $0x18] sm:$0xf]
    %v54 = vld [vmem:[#allocation5 + $0x1c] sm:$0xf]
    %v55 = vld [vmem:[#allocation5 + $0x20] sm:$0xf]
    %v56 = vld [vmem:[#allocation5 + $0x24] sm:$0xf]
    %v57 = vld [vmem:[#allocation5 + $0x28] sm:$0xf]
    %v58 = vld [vmem:[#allocation5 + $0x2c] sm:$0xf]
    %v59 = vld [vmem:[#allocation5 + $0x30] sm:$0xf]
    %v60 = vld [vmem:[#allocation5 + $0x34] sm:$0xf]
    %v61 = vld [vmem:[#allocation5 + $0x38] sm:$0xf]
    %v62 = vld [vmem:[#allocation5 + $0x3c] sm:$0xf]
    %v63 = vld [vmem:[%s2] sm:$0x1]
    %v65 = vlaneseq
    %v66 = vshrl.u32 %v65, 7
    %v67 = vsub.s32 0, %v66
    %v68 = vrot.slane %v63, %v67
    %v86 = vunpack.c.l.b16 %v47
    %v87 = vunpack.c.l.b16 %v48
    %v88 = vunpack.c.l.b16 %v49
    %v89 = vunpack.c.l.b16 %v50
    %v90 = vunpack.c.l.b16 %v51
    %v91 = vunpack.c.l.b16 %v52
    %v92 = vunpack.c.l.b16 %v53
    %v93 = vunpack.c.l.b16 %v54
    %v94 = vunpack.c.l.b16 %v55
    %v95 = vunpack.c.l.b16 %v56
    %v96 = vunpack.c.l.b16 %v57
    %v97 = vunpack.c.l.b16 %v58
    %v98 = vunpack.c.l.b16 %v59
    %v99 = vunpack.c.l.b16 %v60
    %v100 = vunpack.c.l.b16 %v61
    %v101 = vunpack.c.l.b16 %v62
    %v102 = vpack.c.b16 %v87, %v86
    %v103 = vpack.c.b16 %v89, %v88
    %v104 = vpack.c.b16 %v91, %v90
    %v105 = vpack.c.b16 %v93, %v92
    %v106 = vpack.c.b16 %v95, %v94
    %v107 = vpack.c.b16 %v97, %v96
    %v108 = vpack.c.b16 %v99, %v98
    %v109 = vpack.c.b16 %v101, %v100
    %118 = vmatprep.subr.bf16.mxu0 0
    %119 = vmatpush1.bf16.msra.mxu0 %v109
    %120 = vmatprep.subr.bf16.mxu0 0
    %121 = vmatpush1.bf16.msra.mxu0 %v108
    %122 = vmatprep.subr.bf16.mxu0 0
    %123 = vmatpush1.bf16.msra.mxu0 %v107
    %124 = vmatprep.subr.bf16.mxu0 0
    %125 = vmatpush1.bf16.msra.mxu0 %v106
    %126 = vmatprep.subr.bf16.mxu0 0
    %127 = vmatpush1.bf16.msra.mxu0 %v105
    %128 = vmatprep.subr.bf16.mxu0 0
    %129 = vmatpush1.bf16.msra.mxu0 %v104
    %130 = vmatprep.subr.bf16.mxu0 0
    %131 = vmatpush1.bf16.msra.mxu0 %v103
    %132 = vmatprep.subr.bf16.mxu0 0
    %133 = vmatpush1.bf16.msra.mxu0 %v102
    %134 = vmatprep.subr.bf16.mxu0 0
    %135 = vmatpush2.bf16.msra.mxu0 0
    %136 = vmatprep.subr.bf16.mxu0 0
    %137 = vmatpush2.bf16.msra.mxu0 0
    %138 = vmatprep.subr.bf16.mxu0 0
    %139 = vmatpush2.bf16.msra.mxu0 0
    %140 = vmatprep.subr.bf16.mxu0 0
    %141 = vmatpush2.bf16.msra.mxu0 0
    %142 = vmatprep.subr.bf16.mxu0 0
    %143 = vmatpush2.bf16.msra.mxu0 0
    %144 = vmatprep.subr.bf16.mxu0 0
    %145 = vmatpush2.bf16.msra.mxu0 0
    %146 = vmatprep.subr.bf16.mxu0 0
    %147 = vmatpush2.bf16.msra.mxu0 0
    %148 = vmatprep.subr.bf16.mxu0 0
    %149 = vmatpush2.bf16.msra.mxu0 0
    %150 = vmatprep.mubr.bf16.mxu0 0
    %151 = vmatmul.mubr.bf16.gmra.mxu0 %v46
    %v152 = vpop.f32.mrf.mxu0
    %v153 = vadd.f32 %v68, %v152
    %v154 = vpop.f32.mrf.mxu0
    %v155 = vpop.f32.mrf.mxu0
    %v156 = vadd.f32 %v68, %v155
    %v157 = vpop.f32.mrf.mxu0
    %158 = vdwg.mxu0
    %159 = vst [vmem:[#allocation7] sm:$0xff] %v153
    %160 = vst [vmem:[#allocation7 + $0x8] sm:$0xff] %v156
    // Predicated region
    $region22: #{tpu_custom_call.1} parent=1 // pred_check
      _
    $region23: #{tpu_custom_call.1} parent=1 // pred_check_branch
      %162 = sbr.rel (0) target = $region25
    $region24: #{tpu_custom_call.1} parent=1 // pred_region
      %s164 = ssub.s32 256, 256
      %165 = vsyncadd [#allocation4], %s164
      %s166 = sshll.u32 [#allocation7], 4
      %s167 = int_to_ptr.vmem [resolvable:$true] %s166
      %172 = dma.vmem_to_hbm [thread:$0]  %s167, 256, %s3, [#allocation4], 128, 128, 8
    $region25: #{tpu_custom_call.1} parent=1 // pred_fallthru
      _
    // Predicated region
    $region26: #{tpu_custom_call.1} parent=1 // pred_check
      _
    $region27: #{tpu_custom_call.1} parent=1 // pred_check_branch
      %174 = sbr.rel (0) target = $region29
    $region28: #{tpu_custom_call.1} parent=1 // pred_region
      %175 = dma.done [#allocation4], 256
    $region29: #{tpu_custom_call.1} parent=1 // pred_fallthru
      _
    %176 = vsyncpa [#allocation3], 1
    %177 = vsyncpa [#allocation6], 1
    %178 = vsyncpa [#allocation4], 1

</llo_original>
